<compile_context>
chip_gen: v7x
topology: tpu7x:2x2x1
jax: 0.10.0
libtpu: 0.0.40
codegen_flags: <defaults>
</compile_context>

<pallas_src>
import math

import numpy as np
import jax
import jax.numpy as jnp
from jax.experimental import pallas as pl
from jax.experimental.pallas import tpu as pltpu

# Synthetic irreps: "4x0e + 4x1e + 2x2e"  -> dim = 4 + 12 + 10 = 26, 10 channels
IRREPS = [(4, 0), (4, 1), (2, 2)]          # list of (multiplicity, l)
IRREP_NORMALIZATION = "component"
MULTIPLIER = 4.0


def irreps_dim(irreps):
    return sum(mul * (2 * l + 1) for mul, l in irreps)


def irreps_num_channels(irreps):
    return sum(mul for mul, _ in irreps)


def norm_factor(l, irrep_normalization):
    if irrep_normalization == "norm":
        return math.sqrt(2 * l + 1)
    # 'component' and 'none' coincide for l x l -> 0e
    return 1.0 / math.sqrt(2 * l + 1)


def build_projection(irreps, irrep_normalization, multiplier, dtype=jnp.float32):
    """Dense (D, C) matrix implementing the per-channel segmented inner product."""
    D = irreps_dim(irreps)
    C = irreps_num_channels(irreps)
    w = np.zeros((D, C), dtype=np.float32)
    comp = 0
    chan = 0
    for mul, l in irreps:
        f = multiplier * norm_factor(l, irrep_normalization)
        for _ in range(mul):
            for _ in range(2 * l + 1):
                w[comp, chan] = f
                comp += 1
            chan += 1
    return jnp.asarray(w, dtype=dtype)


# ---------------- Pallas kernel ----------------

def _inner_product_error_kernel(d_ref, q_ref, w_ref, o_ref):
    # Elementwise product on the VPU.  A single cast to f32 is enough: the
    # mixed multiply promotes the other operand, so bf16 inputs still reduce
    # in f32 (inputs were DMA'd in their narrow dtype — HBM traffic minimal).
    prod = d_ref[...].astype(jnp.float32) * q_ref[...]
    # Tiny (tile_n, 26) @ (26, 10) segmented reduction on the MXU.
    o_ref[...] = jnp.dot(
        prod, w_ref[...], preferred_element_type=jnp.float32
    ).astype(o_ref.dtype)


def inner_product_error(descriptor, query_feature, w, *, tile_n=8192):
    """descriptor, query_feature: (N, D); w: (D, C). Returns (N, C)."""
    N, D = descriptor.shape
    C = w.shape[1]

    # tile_n: multiple of 128, clamped so tiny N does not force a huge
    # (mostly masked) block.  No padding / transposing of the inputs — they
    # are consumed as-is; the last block may be ragged.
    tile_n = max(128, (int(tile_n) // 128) * 128)
    tile_n = min(tile_n, pl.cdiv(N, 128) * 128)
    grid = (pl.cdiv(N, tile_n),)

    # VMEM blocks are lane-padded (last dim 26 / 10 -> 128 lanes); size the
    # scoped limit for 2 buffers x (2 inputs + 1 output) plus headroom, and
    # clamp to stay inside v7x's 64 MiB physical VMEM.
    itemsize = max(jnp.dtype(descriptor.dtype).itemsize, jnp.dtype(w.dtype).itemsize)
    block_bytes = tile_n * 128 * itemsize
    vmem_limit = int(min(max(6 * block_bytes + (4 << 20), 32 << 20), 56 << 20))

    return pl.pallas_call(
        _inner_product_error_kernel,
        out_shape=jax.ShapeDtypeStruct((N, C), descriptor.dtype),
        grid=grid,
        in_specs=[
            pl.BlockSpec((tile_n, D), lambda i: (i, 0)),   # descriptor tile
            pl.BlockSpec((tile_n, D), lambda i: (i, 0)),   # query tile
            pl.BlockSpec((D, C), lambda i: (0, 0)),        # W, resident in VMEM
        ],
        out_specs=pl.BlockSpec((tile_n, C), lambda i: (i, 0)),
        compiler_params=pltpu.CompilerParams(
            dimension_semantics=("parallel",),
            vmem_limit_bytes=vmem_limit,
        ),
    )(descriptor, query_feature, w)


# ---------------- reference (pure JAX) ----------------

def inner_product_error_ref(descriptor, query_feature, irreps, irrep_normalization,
                            multiplier):
    outs = []
    comp = 0
    for mul, l in irreps:
        d = 2 * l + 1
        f = norm_factor(l, irrep_normalization)
        x = descriptor[:, comp:comp + mul * d].reshape(-1, mul, d)
        y = query_feature[:, comp:comp + mul * d].reshape(-1, mul, d)
        outs.append(f * jnp.sum(x * y, axis=-1))
        comp += mul * d
    return multiplier * jnp.concatenate(outs, axis=-1)


if __name__ == "__main__":
    N = 300                                 # small demo; exercises a ragged block
    D = irreps_dim(IRREPS)                  # 26
    C = irreps_num_channels(IRREPS)         # 10

    key = jax.random.PRNGKey(0)
    kd, kq = jax.random.split(key)
    descriptor = jax.random.normal(kd, (N, D), dtype=jnp.float32)
    query_feature = jax.random.normal(kq, (N, D), dtype=jnp.float32)

    w = build_projection(IRREPS, IRREP_NORMALIZATION, MULTIPLIER)
    ref = inner_product_error_ref(descriptor, query_feature, IRREPS,
                                  IRREP_NORMALIZATION, MULTIPLIER)

    # Default (single clamped block) and multi-block + ragged-last-block paths.
    out = jax.block_until_ready(inner_product_error(descriptor, query_feature, w))
    out_tiled = jax.block_until_ready(
        inner_product_error(descriptor, query_feature, w, tile_n=128))

    assert out.shape == (N, C)
    assert jnp.allclose(out, ref, atol=1e-5, rtol=1e-5)
    assert jnp.allclose(out_tiled, ref, atol=1e-5, rtol=1e-5)

    print("KERNEL_OK")
</pallas_src>

<mosaic_0001>
module attributes {stable_mosaic.version = 11 : i64} {
  func.func @_inner_product_error_kernel(%arg0: i32, %arg1: memref<384x26xf32, #tpu.memory_space<vmem>>, %arg2: memref<384x26xf32, #tpu.memory_space<vmem>>, %arg3: memref<26x10xf32, #tpu.memory_space<vmem>>, %arg4: memref<384x10xf32, #tpu.memory_space<vmem>>) attributes {dimension_semantics = [#tpu.dimension_semantics<parallel>], iteration_bounds = array<i64: 1>, scalar_prefetch = 0 : i64, scratch_operands = 0 : i64, tpu.core_type = #tpu.core_type<tc>, window_params = [{transform_indices = @transform_0, window_bounds = array<i64: 384, 26>}, {transform_indices = @transform_1, window_bounds = array<i64: 384, 26>}, {pipeline_mode = #tpu.pipeline_mode<synchronous>, transform_indices = @transform_2, window_bounds = array<i64: 26, 10>}, {transform_indices = @transform_3, window_bounds = array<i64: 384, 10>}]} {
    %c0 = arith.constant 0 : index
    %c0_0 = arith.constant 0 : index
    %0 = vector.load %arg1[%c0, %c0_0] : memref<384x26xf32, #tpu.memory_space<vmem>>, vector<384x26xf32>
    %c0_1 = arith.constant 0 : index
    %c0_2 = arith.constant 0 : index
    %1 = vector.load %arg2[%c0_1, %c0_2] : memref<384x26xf32, #tpu.memory_space<vmem>>, vector<384x26xf32>
    %2 = arith.mulf %0, %1 : vector<384x26xf32>
    %c0_3 = arith.constant 0 : index
    %c0_4 = arith.constant 0 : index
    %3 = vector.load %arg3[%c0_3, %c0_4] : memref<26x10xf32, #tpu.memory_space<vmem>>, vector<26x10xf32>
    %cst = arith.constant dense<0.000000e+00> : vector<384x10xf32>
    %4 = tpu.matmul %2, %3, %cst {dimension_numbers = #tpu.dot_dimension_numbers<[1], [0], [0], [1], [0, 0, 1, 1], [], []>} : vector<384x26xf32>, vector<26x10xf32>, vector<384x10xf32> -> vector<384x10xf32>
    %c0_5 = arith.constant 0 : index
    %c0_6 = arith.constant 0 : index
    %5 = vector.load %arg4[%c0_5, %c0_6] : memref<384x10xf32, #tpu.memory_space<vmem>>, vector<384x10xf32>
    tpu.vector_store %arg4[%c0_5, %c0_6], %4 {strides = array<i32>} : memref<384x10xf32, #tpu.memory_space<vmem>>, vector<384x10xf32>,
    return
  }
  func.func @transform_0(%arg0: i32) -> (i32, i32) {
    %c0_i32 = arith.constant 0 : i32
    %c0_i32_0 = arith.constant 0 : i32
    return %arg0, %c0_i32 : i32, i32
  }
  func.func @transform_1(%arg0: i32) -> (i32, i32) {
    %c0_i32 = arith.constant 0 : i32
    %c0_i32_0 = arith.constant 0 : i32
    return %arg0, %c0_i32 : i32, i32
  }
  func.func @transform_2(%arg0: i32) -> (i32, i32) {
    %c0_i32 = arith.constant 0 : i32
    %c0_i32_0 = arith.constant 0 : i32
    %c0_i32_1 = arith.constant 0 : i32
    return %c0_i32, %c0_i32_0 : i32, i32
  }
  func.func @transform_3(%arg0: i32) -> (i32, i32) {
    %c0_i32 = arith.constant 0 : i32
    %c0_i32_0 = arith.constant 0 : i32
    return %arg0, %c0_i32 : i32, i32
  }
}

</mosaic_0001>

<llo_original>
// kernel: tpu_custom_call.1
$region0: #{tpu_custom_call.1}
  #allocation0 [shape = 'u32[]', space=smem, size = 0x4, offset = 0x4, fixed_abs, tag = 'smem constant byte address 0x4 - core index']
  #allocation1 [shape = 'u32[144,128]{1,0:T(1,128)}', space=vmem, size = 0x12000, scoped, tag = 'internal scratch']
  %s0 = inlined_call_operand.vmem [shape: f32[300,26], index: 0, kind: input, shape index: {}]
  %s1 = inlined_call_operand.vmem [shape: f32[300,26], index: 1, kind: input, shape index: {}]
  %s2 = inlined_call_operand.vmem [shape: f32[26,10], index: 2, kind: input, shape index: {}]
  %s3 = inlined_call_operand.vmem [shape: f32[300,10], index: 3, kind: output, shape index: {}]
  %s4 = sld [smem:[#allocation0]]
  $region56: #{tpu_custom_call.1} parent=0
    _
  %s6 = ssub.s32 1, %s4
  %s7 = scalar_select 0, %s6, %s4
  $region1: #{tpu_custom_call.1} parent=0
    #allocation2 [shape = 'u8[196608]{0}', space=vmem, size = 0x30000, scoped, tag = 'output window, operand 0, single buffered']
    // Predicated region
    $region2: #{tpu_custom_call.1} parent=1 // pred_check
      _
    $region3: #{tpu_custom_call.1} parent=1 // pred_check_branch
      %9 = sbr.rel (0) target = $region5
    $region4: #{tpu_custom_call.1} parent=1 // pred_region
      _
    $region5: #{tpu_custom_call.1} parent=1 // pred_fallthru
      _
    // Predicated region
    $region6: #{tpu_custom_call.1} parent=1 // pred_check
      _
    $region7: #{tpu_custom_call.1} parent=1 // pred_check_branch
      %11 = sbr.rel (0) target = $region9
    $region8: #{tpu_custom_call.1} parent=1 // pred_region
      _
    $region9: #{tpu_custom_call.1} parent=1 // pred_fallthru
      _
    // Predicated region
    $region10: #{tpu_custom_call.1} parent=1 // pred_check
      _
    $region11: #{tpu_custom_call.1} parent=1 // pred_check_branch
      %13 = sbr.rel (0) target = $region13
    $region12: #{tpu_custom_call.1} parent=1 // pred_region
      _
    $region13: #{tpu_custom_call.1} parent=1 // pred_fallthru
      _
    %v14 = vld [vmem:[%s0] sm:$0xff]
    %v15 = vld [vmem:[%s0 + $0x8] sm:$0xff]
    %v16 = vld [vmem:[%s0 + $0x10] sm:$0xff]
    %v17 = vld [vmem:[%s0 + $0x18] sm:$0xff]
    %v18 = vld [vmem:[%s0 + $0x20] sm:$0xff]
    %v19 = vld [vmem:[%s0 + $0x28] sm:$0xff]
    %v20 = vld [vmem:[%s0 + $0x30] sm:$0xff]
    %v21 = vld [vmem:[%s0 + $0x38] sm:$0xff]
    %v22 = vld [vmem:[%s0 + $0x40] sm:$0xff]
    %v23 = vld [vmem:[%s0 + $0x48] sm:$0xff]
    %v24 = vld [vmem:[%s0 + $0x50] sm:$0xff]
    %v25 = vld [vmem:[%s0 + $0x58] sm:$0xff]
    %v26 = vld [vmem:[%s0 + $0x60] sm:$0xff]
    %v27 = vld [vmem:[%s0 + $0x68] sm:$0xff]
    %v28 = vld [vmem:[%s0 + $0x70] sm:$0xff]
    %v29 = vld [vmem:[%s0 + $0x78] sm:$0xff]
    %v30 = vld [vmem:[%s0 + $0x80] sm:$0xff]
    %v31 = vld [vmem:[%s0 + $0x88] sm:$0xff]
    %v32 = vld [vmem:[%s0 + $0x90] sm:$0xff]
    %v33 = vld [vmem:[%s0 + $0x98] sm:$0xff]
    %v34 = vld [vmem:[%s0 + $0xa0] sm:$0xff]
    %v35 = vld [vmem:[%s0 + $0xa8] sm:$0xff]
    %v36 = vld [vmem:[%s0 + $0xb0] sm:$0xff]
    %v37 = vld [vmem:[%s0 + $0xb8] sm:$0xff]
    %v38 = vld [vmem:[%s0 + $0xc0] sm:$0xff]
    %v39 = vld [vmem:[%s0 + $0xc8] sm:$0xff]
    %v40 = vld [vmem:[%s0 + $0xd0] sm:$0xff]
    %v41 = vld [vmem:[%s0 + $0xd8] sm:$0xff]
    %v42 = vld [vmem:[%s0 + $0xe0] sm:$0xff]
    %v43 = vld [vmem:[%s0 + $0xe8] sm:$0xff]
    %v44 = vld [vmem:[%s0 + $0xf0] sm:$0xff]
    %v45 = vld [vmem:[%s0 + $0xf8] sm:$0xff]
    %v46 = vld [vmem:[%s0 + $0x100] sm:$0xff]
    %v47 = vld [vmem:[%s0 + $0x108] sm:$0xff]
    %v48 = vld [vmem:[%s0 + $0x110] sm:$0xff]
    %v49 = vld [vmem:[%s0 + $0x118] sm:$0xff]
    %v50 = vld [vmem:[%s0 + $0x120] sm:$0xff]
    %v51 = vld [vmem:[%s0 + $0x128] sm:$0xff]
    %v52 = vld [vmem:[%s0 + $0x130] sm:$0xff]
    %v53 = vld [vmem:[%s0 + $0x138] sm:$0xff]
    %v54 = vld [vmem:[%s0 + $0x140] sm:$0xff]
    %v55 = vld [vmem:[%s0 + $0x148] sm:$0xff]
    %v56 = vld [vmem:[%s0 + $0x150] sm:$0xff]
    %v57 = vld [vmem:[%s0 + $0x158] sm:$0xff]
    %v58 = vld [vmem:[%s0 + $0x160] sm:$0xff]
    %v59 = vld [vmem:[%s0 + $0x168] sm:$0xff]
    %v60 = vld [vmem:[%s0 + $0x170] sm:$0xff]
    %v61 = vld [vmem:[%s0 + $0x178] sm:$0xff]
    %v62 = vld [vmem:[%s1] sm:$0xff]
    %v63 = vld [vmem:[%s1 + $0x8] sm:$0xff]
    %v64 = vld [vmem:[%s1 + $0x10] sm:$0xff]
    %v65 = vld [vmem:[%s1 + $0x18] sm:$0xff]
    %v66 = vld [vmem:[%s1 + $0x20] sm:$0xff]
    %v67 = vld [vmem:[%s1 + $0x28] sm:$0xff]
    %v68 = vld [vmem:[%s1 + $0x30] sm:$0xff]
    %v69 = vld [vmem:[%s1 + $0x38] sm:$0xff]
    %v70 = vld [vmem:[%s1 + $0x40] sm:$0xff]
    %v71 = vld [vmem:[%s1 + $0x48] sm:$0xff]
    %v72 = vld [vmem:[%s1 + $0x50] sm:$0xff]
    %v73 = vld [vmem:[%s1 + $0x58] sm:$0xff]
    %v74 = vld [vmem:[%s1 + $0x60] sm:$0xff]
    %v75 = vld [vmem:[%s1 + $0x68] sm:$0xff]
    %v76 = vld [vmem:[%s1 + $0x70] sm:$0xff]
    %v77 = vld [vmem:[%s1 + $0x78] sm:$0xff]
    %v78 = vld [vmem:[%s1 + $0x80] sm:$0xff]
    %v79 = vld [vmem:[%s1 + $0x88] sm:$0xff]
    %v80 = vld [vmem:[%s1 + $0x90] sm:$0xff]
    %v81 = vld [vmem:[%s1 + $0x98] sm:$0xff]
    %v82 = vld [vmem:[%s1 + $0xa0] sm:$0xff]
    %v83 = vld [vmem:[%s1 + $0xa8] sm:$0xff]
    %v84 = vld [vmem:[%s1 + $0xb0] sm:$0xff]
    %v85 = vld [vmem:[%s1 + $0xb8] sm:$0xff]
    %v86 = vld [vmem:[%s1 + $0xc0] sm:$0xff]
    %v87 = vld [vmem:[%s1 + $0xc8] sm:$0xff]
    %v88 = vld [vmem:[%s1 + $0xd0] sm:$0xff]
    %v89 = vld [vmem:[%s1 + $0xd8] sm:$0xff]
    %v90 = vld [vmem:[%s1 + $0xe0] sm:$0xff]
    %v91 = vld [vmem:[%s1 + $0xe8] sm:$0xff]
    %v92 = vld [vmem:[%s1 + $0xf0] sm:$0xff]
    %v93 = vld [vmem:[%s1 + $0xf8] sm:$0xff]
    %v94 = vld [vmem:[%s1 + $0x100] sm:$0xff]
    %v95 = vld [vmem:[%s1 + $0x108] sm:$0xff]
    %v96 = vld [vmem:[%s1 + $0x110] sm:$0xff]
    %v97 = vld [vmem:[%s1 + $0x118] sm:$0xff]
    %v98 = vld [vmem:[%s1 + $0x120] sm:$0xff]
    %v99 = vld [vmem:[%s1 + $0x128] sm:$0xff]
    %v100 = vld [vmem:[%s1 + $0x130] sm:$0xff]
    %v101 = vld [vmem:[%s1 + $0x138] sm:$0xff]
    %v102 = vld [vmem:[%s1 + $0x140] sm:$0xff]
    %v103 = vld [vmem:[%s1 + $0x148] sm:$0xff]
    %v104 = vld [vmem:[%s1 + $0x150] sm:$0xff]
    %v105 = vld [vmem:[%s1 + $0x158] sm:$0xff]
    %v106 = vld [vmem:[%s1 + $0x160] sm:$0xff]
    %v107 = vld [vmem:[%s1 + $0x168] sm:$0xff]
    %v108 = vld [vmem:[%s1 + $0x170] sm:$0xff]
    %v109 = vld [vmem:[%s1 + $0x178] sm:$0xff]
    %v110 = vmul.f32 %v14, %v62
    %v111 = vmul.f32 %v15, %v63
    %v112 = vmul.f32 %v16, %v64
    %v113 = vmul.f32 %v17, %v65
    %v114 = vmul.f32 %v18, %v66
    %v115 = vmul.f32 %v19, %v67
    %v116 = vmul.f32 %v20, %v68
    %v117 = vmul.f32 %v21, %v69
    %v118 = vmul.f32 %v22, %v70
    %v119 = vmul.f32 %v23, %v71
    %v120 = vmul.f32 %v24, %v72
    %v121 = vmul.f32 %v25, %v73
    %v122 = vmul.f32 %v26, %v74
    %v123 = vmul.f32 %v27, %v75
    %v124 = vmul.f32 %v28, %v76
    %v125 = vmul.f32 %v29, %v77
    %v126 = vmul.f32 %v30, %v78
    %v127 = vmul.f32 %v31, %v79
    %v128 = vmul.f32 %v32, %v80
    %v129 = vmul.f32 %v33, %v81
    %v130 = vmul.f32 %v34, %v82
    %v131 = vmul.f32 %v35, %v83
    %v132 = vmul.f32 %v36, %v84
    %v133 = vmul.f32 %v37, %v85
    %v134 = vmul.f32 %v38, %v86
    %v135 = vmul.f32 %v39, %v87
    %v136 = vmul.f32 %v40, %v88
    %v137 = vmul.f32 %v41, %v89
    %v138 = vmul.f32 %v42, %v90
    %v139 = vmul.f32 %v43, %v91
    %v140 = vmul.f32 %v44, %v92
    %v141 = vmul.f32 %v45, %v93
    %v142 = vmul.f32 %v46, %v94
    %v143 = vmul.f32 %v47, %v95
    %v144 = vmul.f32 %v48, %v96
    %v145 = vmul.f32 %v49, %v97
    %v146 = vmul.f32 %v50, %v98
    %v147 = vmul.f32 %v51, %v99
    %v148 = vmul.f32 %v52, %v100
    %v149 = vmul.f32 %v53, %v101
    %v150 = vmul.f32 %v54, %v102
    %v151 = vmul.f32 %v55, %v103
    %v152 = vmul.f32 %v56, %v104
    %v153 = vmul.f32 %v57, %v105
    %v154 = vmul.f32 %v58, %v106
    %v155 = vmul.f32 %v59, %v107
    %v156 = vmul.f32 %v60, %v108
    %v157 = vmul.f32 %v61, %v109
    %v158 = vld [vmem:[%s2] sm:$0xff]
    %v159 = vld [vmem:[%s2 + $0x8] sm:$0xff]
    %v160 = vld [vmem:[%s2 + $0x10] sm:$0xff]
    %v161 = vld [vmem:[%s2 + $0x18] sm:$0x3]
    %vm162 = vcmask 211968
    %v164 = vsel %vm162, %v110, 0
    %v167 = vsel %vm162, %v111, 0
    %v170 = vsel %vm162, %v112, 0
    %v173 = vsel %vm162, %v113, 0
    %v176 = vsel %vm162, %v114, 0
    %v179 = vsel %vm162, %v115, 0
    %v182 = vsel %vm162, %v116, 0
    %v185 = vsel %vm162, %v117, 0
    %v188 = vsel %vm162, %v118, 0
    %v191 = vsel %vm162, %v119, 0
    %v194 = vsel %vm162, %v120, 0
    %v197 = vsel %vm162, %v121, 0
    %v200 = vsel %vm162, %v122, 0
    %v203 = vsel %vm162, %v123, 0
    %v206 = vsel %vm162, %v124, 0
    %v209 = vsel %vm162, %v125, 0
    %v212 = vsel %vm162, %v126, 0
    %v215 = vsel %vm162, %v127, 0
    %v218 = vsel %vm162, %v128, 0
    %v221 = vsel %vm162, %v129, 0
    %v224 = vsel %vm162, %v130, 0
    %v227 = vsel %vm162, %v131, 0
    %v230 = vsel %vm162, %v132, 0
    %v233 = vsel %vm162, %v133, 0
    %v236 = vsel %vm162, %v134, 0
    %v239 = vsel %vm162, %v135, 0
    %v242 = vsel %vm162, %v136, 0
    %v245 = vsel %vm162, %v137, 0
    %v248 = vsel %vm162, %v138, 0
    %v251 = vsel %vm162, %v139, 0
    %v254 = vsel %vm162, %v140, 0
    %v257 = vsel %vm162, %v141, 0
    %v260 = vsel %vm162, %v142, 0
    %v263 = vsel %vm162, %v143, 0
    %v266 = vsel %vm162, %v144, 0
    %v269 = vsel %vm162, %v145, 0
    %v272 = vsel %vm162, %v146, 0
    %v275 = vsel %vm162, %v147, 0
    %v278 = vsel %vm162, %v148, 0
    %v281 = vsel %vm162, %v149, 0
    %v284 = vsel %vm162, %v150, 0
    %v287 = vsel %vm162, %v151, 0
    %v290 = vsel %vm162, %v152, 0
    %v293 = vsel %vm162, %v153, 0
    %v296 = vsel %vm162, %v154, 0
    %v299 = vsel %vm162, %v155, 0
    %v302 = vsel %vm162, %v156, 0
    %v305 = vsel %vm162, %v157, 0
    %vm307 = vcmask 1041408
    %v309 = vsel %vm307, %v161, 0
    %311 = vmatprep.subr.mxu0 0.0
    %312 = vmatpush1.msra.mxu0 %v158
    %313 = vmatprep.subr.mxu0 0.0
    %314 = vmatpush1.msra.mxu0 %v159
    %315 = vmatprep.subr.mxu0 0.0
    %316 = vmatpush1.msra.mxu0 %v160
    %317 = vmatprep.subr.mxu0 0.0
    %318 = vmatpush1.msra.mxu0 %v309
    %319 = vmatprep.subr.mxu0 0.0
    %320 = vmatpush1.msra.mxu0 0.0
    %321 = vmatprep.subr.mxu0 0.0
    %322 = vmatpush1.msra.mxu0 0.0
    %323 = vmatprep.subr.mxu0 0.0
    %324 = vmatpush1.msra.mxu0 0.0
    %325 = vmatprep.subr.mxu0 0.0
    %326 = vmatpush1.msra.mxu0 0.0
    %327 = vmatprep.subr.mxu0 0.0
    %328 = vmatpush1.msra.mxu0 0.0
    %329 = vmatprep.subr.mxu0 0.0
    %330 = vmatpush1.msra.mxu0 0.0
    %331 = vmatprep.subr.mxu0 0.0
    %332 = vmatpush1.msra.mxu0 0.0
    %333 = vmatprep.subr.mxu0 0.0
    %334 = vmatpush1.msra.mxu0 0.0
    %335 = vmatprep.subr.mxu0 0.0
    %336 = vmatpush1.msra.mxu0 0.0
    %337 = vmatprep.subr.mxu0 0.0
    %338 = vmatpush1.msra.mxu0 0.0
    %339 = vmatprep.subr.mxu0 0.0
    %340 = vmatpush1.msra.mxu0 0.0
    %341 = vmatprep.subr.mxu0 0.0
    %342 = vmatpush1.msra.mxu0 0.0
    %343 = vmatprep.subr.mxu0 0.0
    %344 = vmatpush1.msra.mxu0 0.0
    %345 = vmatprep.subr.mxu0 0.0
    %346 = vmatpush1.msra.mxu0 0.0
    %347 = vmatprep.subr.mxu0 0.0
    %348 = vmatpush1.msra.mxu0 0.0
    %349 = vmatprep.subr.mxu0 0.0
    %350 = vmatpush1.msra.mxu0 0.0
    %351 = vmatprep.subr.mxu0 0.0
    %352 = vmatpush1.msra.mxu0 0.0
    %353 = vmatprep.subr.mxu0 0.0
    %354 = vmatpush1.msra.mxu0 0.0
    %355 = vmatprep.subr.mxu0 0.0
    %356 = vmatpush1.msra.mxu0 0.0
    %357 = vmatprep.subr.mxu0 0.0
    %358 = vmatpush1.msra.mxu0 0.0
    %359 = vmatprep.subr.mxu0 0.0
    %360 = vmatpush1.msra.mxu0 0.0
    %361 = vmatprep.subr.mxu0 0.0
    %362 = vmatpush1.msra.mxu0 0.0
    %363 = vmatprep.subr.mxu0 0.0
    %364 = vmatpush1.msra.mxu0 0.0
    %365 = vmatprep.subr.mxu0 0.0
    %366 = vmatpush1.msra.mxu0 0.0
    %367 = vmatprep.subr.mxu0 0.0
    %368 = vmatpush1.msra.mxu0 0.0
    %369 = vmatprep.subr.mxu0 0.0
    %370 = vmatpush1.msra.mxu0 0.0
    %371 = vmatprep.subr.mxu0 0.0
    %372 = vmatpush1.msra.mxu0 0.0
    %373 = vmatprep.subr.mxu0 0.0
    %374 = vmatpush1.msra.mxu0 0.0
    %375 = vmatprep.mubr.f32.mxu0 0.0
    %376 = vmatmul.mubr.f32.gmra.mrb[0].mxu0 %v164
    %v377 = vpop.f32.mrb[0].mxu0
    %v378 = vadd.f32 0.0, %v377
    %v379 = vpop.f32.mrb[0].mxu0
    %380 = vmatprep.mubr.f32.mxu0 0.0
    %381 = vmatmul.mubr.f32.gmra.mrb[0].mxu0 %v167
    %v382 = vpop.f32.mrb[0].mxu0
    %v383 = vadd.f32 0.0, %v382
    %v384 = vpop.f32.mrb[0].mxu0
    %385 = vmatprep.mubr.f32.mxu0 0.0
    %386 = vmatmul.mubr.f32.gmra.mrb[0].mxu0 %v170
    %v387 = vpop.f32.mrb[0].mxu0
    %v388 = vadd.f32 0.0, %v387
    %v389 = vpop.f32.mrb[0].mxu0
    %390 = vmatprep.mubr.f32.mxu0 0.0
    %391 = vmatmul.mubr.f32.gmra.mrb[0].mxu0 %v173
    %v392 = vpop.f32.mrb[0].mxu0
    %v393 = vadd.f32 0.0, %v392
    %v394 = vpop.f32.mrb[0].mxu0
    %395 = vmatprep.mubr.f32.mxu0 0.0
    %396 = vmatmul.mubr.f32.gmra.mrb[0].mxu0 %v176
    %v397 = vpop.f32.mrb[0].mxu0
    %v398 = vadd.f32 0.0, %v397
    %v399 = vpop.f32.mrb[0].mxu0
    %400 = vmatprep.mubr.f32.mxu0 0.0
    %401 = vmatmul.mubr.f32.gmra.mrb[0].mxu0 %v179
    %v402 = vpop.f32.mrb[0].mxu0
    %v403 = vadd.f32 0.0, %v402
    %v404 = vpop.f32.mrb[0].mxu0
    %405 = vmatprep.mubr.f32.mxu0 0.0
    %406 = vmatmul.mubr.f32.gmra.mrb[0].mxu0 %v182
    %v407 = vpop.f32.mrb[0].mxu0
    %v408 = vadd.f32 0.0, %v407
    %v409 = vpop.f32.mrb[0].mxu0
    %410 = vmatprep.mubr.f32.mxu0 0.0
    %411 = vmatmul.mubr.f32.gmra.mrb[0].mxu0 %v185
    %v412 = vpop.f32.mrb[0].mxu0
    %v413 = vadd.f32 0.0, %v412
    %v414 = vpop.f32.mrb[0].mxu0
    %415 = vmatprep.mubr.f32.mxu0 0.0
    %416 = vmatmul.mubr.f32.gmra.mrb[0].mxu0 %v188
    %v417 = vpop.f32.mrb[0].mxu0
    %v418 = vadd.f32 0.0, %v417
    %v419 = vpop.f32.mrb[0].mxu0
    %420 = vmatprep.mubr.f32.mxu0 0.0
    %421 = vmatmul.mubr.f32.gmra.mrb[0].mxu0 %v191
    %v422 = vpop.f32.mrb[0].mxu0
    %v423 = vadd.f32 0.0, %v422
    %v424 = vpop.f32.mrb[0].mxu0
    %425 = vmatprep.mubr.f32.mxu0 0.0
    %426 = vmatmul.mubr.f32.gmra.mrb[0].mxu0 %v194
    %v427 = vpop.f32.mrb[0].mxu0
    %v428 = vadd.f32 0.0, %v427
    %v429 = vpop.f32.mrb[0].mxu0
    %430 = vmatprep.mubr.f32.mxu0 0.0
    %431 = vmatmul.mubr.f32.gmra.mrb[0].mxu0 %v197
    %v432 = vpop.f32.mrb[0].mxu0
    %v433 = vadd.f32 0.0, %v432
    %v434 = vpop.f32.mrb[0].mxu0
    %435 = vmatprep.mubr.f32.mxu0 0.0
    %436 = vmatmul.mubr.f32.gmra.mrb[0].mxu0 %v200
    %v437 = vpop.f32.mrb[0].mxu0
    %v438 = vadd.f32 0.0, %v437
    %v439 = vpop.f32.mrb[0].mxu0
    %440 = vmatprep.mubr.f32.mxu0 0.0
    %441 = vmatmul.mubr.f32.gmra.mrb[0].mxu0 %v203
    %v442 = vpop.f32.mrb[0].mxu0
    %v443 = vadd.f32 0.0, %v442
    %v444 = vpop.f32.mrb[0].mxu0
    %445 = vmatprep.mubr.f32.mxu0 0.0
    %446 = vmatmul.mubr.f32.gmra.mrb[0].mxu0 %v206
    %v447 = vpop.f32.mrb[0].mxu0
    %v448 = vadd.f32 0.0, %v447
    %v449 = vpop.f32.mrb[0].mxu0
    %450 = vmatprep.mubr.f32.mxu0 0.0
    %451 = vmatmul.mubr.f32.gmra.mrb[0].mxu0 %v209
    %v452 = vpop.f32.mrb[0].mxu0
    %v453 = vadd.f32 0.0, %v452
    %v454 = vpop.f32.mrb[0].mxu0
    %455 = vmatprep.mubr.f32.mxu0 0.0
    %456 = vmatmul.mubr.f32.gmra.mrb[0].mxu0 %v212
    %v457 = vpop.f32.mrb[0].mxu0
    %v458 = vadd.f32 0.0, %v457
    %v459 = vpop.f32.mrb[0].mxu0
    %460 = vmatprep.mubr.f32.mxu0 0.0
    %461 = vmatmul.mubr.f32.gmra.mrb[0].mxu0 %v215
    %v462 = vpop.f32.mrb[0].mxu0
    %v463 = vadd.f32 0.0, %v462
    %v464 = vpop.f32.mrb[0].mxu0
    %465 = vmatprep.mubr.f32.mxu0 0.0
    %466 = vmatmul.mubr.f32.gmra.mrb[0].mxu0 %v218
    %v467 = vpop.f32.mrb[0].mxu0
    %v468 = vadd.f32 0.0, %v467
    %v469 = vpop.f32.mrb[0].mxu0
    %470 = vmatprep.mubr.f32.mxu0 0.0
    %471 = vmatmul.mubr.f32.gmra.mrb[0].mxu0 %v221
    %v472 = vpop.f32.mrb[0].mxu0
    %v473 = vadd.f32 0.0, %v472
    %v474 = vpop.f32.mrb[0].mxu0
    %475 = vmatprep.mubr.f32.mxu0 0.0
    %476 = vmatmul.mubr.f32.gmra.mrb[0].mxu0 %v224
    %v477 = vpop.f32.mrb[0].mxu0
    %v478 = vadd.f32 0.0, %v477
    %v479 = vpop.f32.mrb[0].mxu0
    %480 = vmatprep.mubr.f32.mxu0 0.0
    %481 = vmatmul.mubr.f32.gmra.mrb[0].mxu0 %v227
    %v482 = vpop.f32.mrb[0].mxu0
    %v483 = vadd.f32 0.0, %v482
    %v484 = vpop.f32.mrb[0].mxu0
    %485 = vmatprep.mubr.f32.mxu0 0.0
    %486 = vmatmul.mubr.f32.gmra.mrb[0].mxu0 %v230
    %v487 = vpop.f32.mrb[0].mxu0
    %v488 = vadd.f32 0.0, %v487
    %v489 = vpop.f32.mrb[0].mxu0
    %490 = vmatprep.mubr.f32.mxu0 0.0
    %491 = vmatmul.mubr.f32.gmra.mrb[0].mxu0 %v233
    %v492 = vpop.f32.mrb[0].mxu0
    %v493 = vadd.f32 0.0, %v492
    %v494 = vpop.f32.mrb[0].mxu0
    %495 = vmatprep.mubr.f32.mxu0 0.0
    %496 = vmatmul.mubr.f32.gmra.mrb[0].mxu0 %v236
    %v497 = vpop.f32.mrb[0].mxu0
    %v498 = vadd.f32 0.0, %v497
    %v499 = vpop.f32.mrb[0].mxu0
    %500 = vmatprep.mubr.f32.mxu0 0.0
    %501 = vmatmul.mubr.f32.gmra.mrb[0].mxu0 %v239
    %v502 = vpop.f32.mrb[0].mxu0
    %v503 = vadd.f32 0.0, %v502
    %v504 = vpop.f32.mrb[0].mxu0
    %505 = vmatprep.mubr.f32.mxu0 0.0
    %506 = vmatmul.mubr.f32.gmra.mrb[0].mxu0 %v242
    %v507 = vpop.f32.mrb[0].mxu0
    %v508 = vadd.f32 0.0, %v507
    %v509 = vpop.f32.mrb[0].mxu0
    %510 = vmatprep.mubr.f32.mxu0 0.0
    %511 = vmatmul.mubr.f32.gmra.mrb[0].mxu0 %v245
    %v512 = vpop.f32.mrb[0].mxu0
    %v513 = vadd.f32 0.0, %v512
    %v514 = vpop.f32.mrb[0].mxu0
    %515 = vmatprep.mubr.f32.mxu0 0.0
    %516 = vmatmul.mubr.f32.gmra.mrb[0].mxu0 %v248
    %v517 = vpop.f32.mrb[0].mxu0
    %v518 = vadd.f32 0.0, %v517
    %v519 = vpop.f32.mrb[0].mxu0
    %520 = vmatprep.mubr.f32.mxu0 0.0
    %521 = vmatmul.mubr.f32.gmra.mrb[0].mxu0 %v251
    %v522 = vpop.f32.mrb[0].mxu0
    %v523 = vadd.f32 0.0, %v522
    %v524 = vpop.f32.mrb[0].mxu0
    %525 = vmatprep.mubr.f32.mxu0 0.0
    %526 = vmatmul.mubr.f32.gmra.mrb[0].mxu0 %v254
    %v527 = vpop.f32.mrb[0].mxu0
    %v528 = vadd.f32 0.0, %v527
    %v529 = vpop.f32.mrb[0].mxu0
    %530 = vmatprep.mubr.f32.mxu0 0.0
    %531 = vmatmul.mubr.f32.gmra.mrb[0].mxu0 %v257
    %v532 = vpop.f32.mrb[0].mxu0
    %v533 = vadd.f32 0.0, %v532
    %v534 = vpop.f32.mrb[0].mxu0
    %535 = vmatprep.mubr.f32.mxu0 0.0
    %536 = vmatmul.mubr.f32.gmra.mrb[0].mxu0 %v260
    %v537 = vpop.f32.mrb[0].mxu0
    %v538 = vadd.f32 0.0, %v537
    %v539 = vpop.f32.mrb[0].mxu0
    %540 = vmatprep.mubr.f32.mxu0 0.0
    %541 = vmatmul.mubr.f32.gmra.mrb[0].mxu0 %v263
    %v542 = vpop.f32.mrb[0].mxu0
    %v543 = vadd.f32 0.0, %v542
    %v544 = vpop.f32.mrb[0].mxu0
    %545 = vmatprep.mubr.f32.mxu0 0.0
    %546 = vmatmul.mubr.f32.gmra.mrb[0].mxu0 %v266
    %v547 = vpop.f32.mrb[0].mxu0
    %v548 = vadd.f32 0.0, %v547
    %v549 = vpop.f32.mrb[0].mxu0
    %550 = vmatprep.mubr.f32.mxu0 0.0
    %551 = vmatmul.mubr.f32.gmra.mrb[0].mxu0 %v269
    %v552 = vpop.f32.mrb[0].mxu0
    %v553 = vadd.f32 0.0, %v552
    %v554 = vpop.f32.mrb[0].mxu0
    %555 = vmatprep.mubr.f32.mxu0 0.0
    %556 = vmatmul.mubr.f32.gmra.mrb[0].mxu0 %v272
    %v557 = vpop.f32.mrb[0].mxu0
    %v558 = vadd.f32 0.0, %v557
    %v559 = vpop.f32.mrb[0].mxu0
    %560 = vmatprep.mubr.f32.mxu0 0.0
    %561 = vmatmul.mubr.f32.gmra.mrb[0].mxu0 %v275
    %v562 = vpop.f32.mrb[0].mxu0
    %v563 = vadd.f32 0.0, %v562
    %v564 = vpop.f32.mrb[0].mxu0
    %565 = vmatprep.mubr.f32.mxu0 0.0
    %566 = vmatmul.mubr.f32.gmra.mrb[0].mxu0 %v278
    %v567 = vpop.f32.mrb[0].mxu0
    %v568 = vadd.f32 0.0, %v567
    %v569 = vpop.f32.mrb[0].mxu0
    %570 = vmatprep.mubr.f32.mxu0 0.0
    %571 = vmatmul.mubr.f32.gmra.mrb[0].mxu0 %v281
    %v572 = vpop.f32.mrb[0].mxu0
    %v573 = vadd.f32 0.0, %v572
    %v574 = vpop.f32.mrb[0].mxu0
    %575 = vmatprep.mubr.f32.mxu0 0.0
    %576 = vmatmul.mubr.f32.gmra.mrb[0].mxu0 %v284
    %v577 = vpop.f32.mrb[0].mxu0
    %v578 = vadd.f32 0.0, %v577
    %v579 = vpop.f32.mrb[0].mxu0
    %580 = vmatprep.mubr.f32.mxu0 0.0
    %581 = vmatmul.mubr.f32.gmra.mrb[0].mxu0 %v287
    %v582 = vpop.f32.mrb[0].mxu0
    %v583 = vadd.f32 0.0, %v582
    %v584 = vpop.f32.mrb[0].mxu0
    %585 = vmatprep.mubr.f32.mxu0 0.0
    %586 = vmatmul.mubr.f32.gmra.mrb[0].mxu0 %v290
    %v587 = vpop.f32.mrb[0].mxu0
    %v588 = vadd.f32 0.0, %v587
    %v589 = vpop.f32.mrb[0].mxu0
    %590 = vmatprep.mubr.f32.mxu0 0.0
    %591 = vmatmul.mubr.f32.gmra.mrb[0].mxu0 %v293
    %v592 = vpop.f32.mrb[0].mxu0
    %v593 = vadd.f32 0.0, %v592
    %v594 = vpop.f32.mrb[0].mxu0
    %595 = vmatprep.mubr.f32.mxu0 0.0
    %596 = vmatmul.mubr.f32.gmra.mrb[0].mxu0 %v296
    %v597 = vpop.f32.mrb[0].mxu0
    %v598 = vadd.f32 0.0, %v597
    %v599 = vpop.f32.mrb[0].mxu0
    %600 = vmatprep.mubr.f32.mxu0 0.0
    %601 = vmatmul.mubr.f32.gmra.mrb[0].mxu0 %v299
    %v602 = vpop.f32.mrb[0].mxu0
    %v603 = vadd.f32 0.0, %v602
    %v604 = vpop.f32.mrb[0].mxu0
    %605 = vmatprep.mubr.f32.mxu0 0.0
    %606 = vmatmul.mubr.f32.gmra.mrb[0].mxu0 %v302
    %v607 = vpop.f32.mrb[0].mxu0
    %v608 = vadd.f32 0.0, %v607
    %v609 = vpop.f32.mrb[0].mxu0
    %610 = vmatprep.mubr.f32.mxu0 0.0
    %611 = vmatmul.mubr.f32.gmra.mrb[0].mxu0 %v305
    %v612 = vpop.f32.mrb[0].mxu0
    %v613 = vadd.f32 0.0, %v612
    %v614 = vpop.f32.mrb[0].mxu0
    %615 = vdwg.mxu0
    %vm616 = vcmask 80896
    %617 = vst.msk [vmem:[#allocation2] sm:$0xff] %vm616, %v378
    %618 = vst.msk [vmem:[#allocation2 + $0x8] sm:$0xff] %vm616, %v383
    %619 = vst.msk [vmem:[#allocation2 + $0x10] sm:$0xff] %vm616, %v388
    %620 = vst.msk [vmem:[#allocation2 + $0x18] sm:$0xff] %vm616, %v393
    %621 = vst.msk [vmem:[#allocation2 + $0x20] sm:$0xff] %vm616, %v398
    %622 = vst.msk [vmem:[#allocation2 + $0x28] sm:$0xff] %vm616, %v403
    %623 = vst.msk [vmem:[#allocation2 + $0x30] sm:$0xff] %vm616, %v408
    %624 = vst.msk [vmem:[#allocation2 + $0x38] sm:$0xff] %vm616, %v413
    %625 = vst.msk [vmem:[#allocation2 + $0x40] sm:$0xff] %vm616, %v418
    %626 = vst.msk [vmem:[#allocation2 + $0x48] sm:$0xff] %vm616, %v423
    %627 = vst.msk [vmem:[#allocation2 + $0x50] sm:$0xff] %vm616, %v428
    %628 = vst.msk [vmem:[#allocation2 + $0x58] sm:$0xff] %vm616, %v433
    %629 = vst.msk [vmem:[#allocation2 + $0x60] sm:$0xff] %vm616, %v438
    %630 = vst.msk [vmem:[#allocation2 + $0x68] sm:$0xff] %vm616, %v443
    %631 = vst.msk [vmem:[#allocation2 + $0x70] sm:$0xff] %vm616, %v448
    %632 = vst.msk [vmem:[#allocation2 + $0x78] sm:$0xff] %vm616, %v453
    %633 = vst.msk [vmem:[#allocation2 + $0x80] sm:$0xff] %vm616, %v458
    %634 = vst.msk [vmem:[#allocation2 + $0x88] sm:$0xff] %vm616, %v463
    %635 = vst.msk [vmem:[#allocation2 + $0x90] sm:$0xff] %vm616, %v468
    %636 = vst.msk [vmem:[#allocation2 + $0x98] sm:$0xff] %vm616, %v473
    %637 = vst.msk [vmem:[#allocation2 + $0xa0] sm:$0xff] %vm616, %v478
    %638 = vst.msk [vmem:[#allocation2 + $0xa8] sm:$0xff] %vm616, %v483
    %639 = vst.msk [vmem:[#allocation2 + $0xb0] sm:$0xff] %vm616, %v488
    %640 = vst.msk [vmem:[#allocation2 + $0xb8] sm:$0xff] %vm616, %v493
    %641 = vst.msk [vmem:[#allocation2 + $0xc0] sm:$0xff] %vm616, %v498
    %642 = vst.msk [vmem:[#allocation2 + $0xc8] sm:$0xff] %vm616, %v503
    %643 = vst.msk [vmem:[#allocation2 + $0xd0] sm:$0xff] %vm616, %v508
    %644 = vst.msk [vmem:[#allocation2 + $0xd8] sm:$0xff] %vm616, %v513
    %645 = vst.msk [vmem:[#allocation2 + $0xe0] sm:$0xff] %vm616, %v518
    %646 = vst.msk [vmem:[#allocation2 + $0xe8] sm:$0xff] %vm616, %v523
    %647 = vst.msk [vmem:[#allocation2 + $0xf0] sm:$0xff] %vm616, %v528
    %648 = vst.msk [vmem:[#allocation2 + $0xf8] sm:$0xff] %vm616, %v533
    %649 = vst.msk [vmem:[#allocation2 + $0x100] sm:$0xff] %vm616, %v538
    %650 = vst.msk [vmem:[#allocation2 + $0x108] sm:$0xff] %vm616, %v543
    %651 = vst.msk [vmem:[#allocation2 + $0x110] sm:$0xff] %vm616, %v548
    %652 = vst.msk [vmem:[#allocation2 + $0x118] sm:$0xff] %vm616, %v553
    %653 = vst.msk [vmem:[#allocation2 + $0x120] sm:$0xff] %vm616, %v558
    %654 = vst.msk [vmem:[#allocation2 + $0x128] sm:$0xff] %vm616, %v563
    %655 = vst.msk [vmem:[#allocation2 + $0x130] sm:$0xff] %vm616, %v568
    %656 = vst.msk [vmem:[#allocation2 + $0x138] sm:$0xff] %vm616, %v573
    %657 = vst.msk [vmem:[#allocation2 + $0x140] sm:$0xff] %vm616, %v578
    %658 = vst.msk [vmem:[#allocation2 + $0x148] sm:$0xff] %vm616, %v583
    %659 = vst.msk [vmem:[#allocation2 + $0x150] sm:$0xff] %vm616, %v588
    %660 = vst.msk [vmem:[#allocation2 + $0x158] sm:$0xff] %vm616, %v593
    %661 = vst.msk [vmem:[#allocation2 + $0x160] sm:$0xff] %vm616, %v598
    %662 = vst.msk [vmem:[#allocation2 + $0x168] sm:$0xff] %vm616, %v603
    %663 = vst.msk [vmem:[#allocation2 + $0x170] sm:$0xff] %vm616, %v608
    %664 = vst.msk [vmem:[#allocation2 + $0x178] sm:$0xff] %vm616, %v613
    // Predicated region
    $region14: #{tpu_custom_call.1} parent=1 // pred_check
      _
    $region15: #{tpu_custom_call.1} parent=1 // pred_check_branch
      %666 = sbr.rel (0) target = $region17
    $region16: #{tpu_custom_call.1} parent=1 // pred_region
      // Predicated region
      $region18: #{tpu_custom_call.1} parent=16 // pred_check
        _
      $region19: #{tpu_custom_call.1} parent=16 // pred_check_branch
        %668 = sbr.rel (0) target = $region21
      $region20: #{tpu_custom_call.1} parent=16 // pred_region
        // Predicated region
        $region22: #{tpu_custom_call.1} parent=20 // pred_check
          _
        $region23: #{tpu_custom_call.1} parent=20 // pred_check_branch
          %670 = sbr.rel (0) target = $region25
        $region24: #{tpu_custom_call.1} parent=20 // pred_region
          // Predicated region
          $region37: #{tpu_custom_call.1} parent=24 // pred_check
            _
          $region38: #{tpu_custom_call.1} parent=24 // pred_check_branch
            %759 = sbr.rel (0) target = $region40
          $region39: #{tpu_custom_call.1} parent=24 // pred_region
            loop: start=0, step=1, limit=1
            $region41: #{tpu_custom_call.1} parent=39 // loop_pre_header
              _
            $region42: #{tpu_custom_call.1} parent=39 // loop_header
              %s761 = sphi 0, %s765
              %p762 = scmp.ge.s32.totalorder %s761, 1
              %s766 = sphi [#allocation2], [#allocation2]
              %s767 = sphi %s3, %s3
            $region43: #{tpu_custom_call.1} parent=39 // loop_header_branch
              %764 = sbr.rel (%p762) target = $region47
            $region44: #{tpu_custom_call.1} parent=39 // loop_body
              %v768 = vld [vmem:[%s766] sm:$0xff]
              %769 = vst [vmem:[%s767] sm:$0xff] %v768
              %v770 = vld [vmem:[%s766 + $0x8] sm:$0xff]
              %771 = vst [vmem:[%s767 + $0x8] sm:$0xff] %v770
              %v772 = vld [vmem:[%s766 + $0x10] sm:$0xff]
              %773 = vst [vmem:[%s767 + $0x10] sm:$0xff] %v772
              %v774 = vld [vmem:[%s766 + $0x18] sm:$0xff]
              %775 = vst [vmem:[%s767 + $0x18] sm:$0xff] %v774
              %v776 = vld [vmem:[%s766 + $0x20] sm:$0xff]
              %777 = vst [vmem:[%s767 + $0x20] sm:$0xff] %v776
              %v778 = vld [vmem:[%s766 + $0x28] sm:$0xff]
              %779 = vst [vmem:[%s767 + $0x28] sm:$0xff] %v778
              %v780 = vld [vmem:[%s766 + $0x30] sm:$0xff]
              %781 = vst [vmem:[%s767 + $0x30] sm:$0xff] %v780
              %v782 = vld [vmem:[%s766 + $0x38] sm:$0xff]
              %783 = vst [vmem:[%s767 + $0x38] sm:$0xff] %v782
              %v784 = vld [vmem:[%s766 + $0x40] sm:$0xff]
              %785 = vst [vmem:[%s767 + $0x40] sm:$0xff] %v784
              %v786 = vld [vmem:[%s766 + $0x48] sm:$0xff]
              %787 = vst [vmem:[%s767 + $0x48] sm:$0xff] %v786
              %v788 = vld [vmem:[%s766 + $0x50] sm:$0xff]
              %789 = vst [vmem:[%s767 + $0x50] sm:$0xff] %v788
              %v790 = vld [vmem:[%s766 + $0x58] sm:$0xff]
              %791 = vst [vmem:[%s767 + $0x58] sm:$0xff] %v790
              %v792 = vld [vmem:[%s766 + $0x60] sm:$0xff]
              %793 = vst [vmem:[%s767 + $0x60] sm:$0xff] %v792
              %v794 = vld [vmem:[%s766 + $0x68] sm:$0xff]
              %795 = vst [vmem:[%s767 + $0x68] sm:$0xff] %v794
              %v796 = vld [vmem:[%s766 + $0x70] sm:$0xff]
              %797 = vst [vmem:[%s767 + $0x70] sm:$0xff] %v796
              %v798 = vld [vmem:[%s766 + $0x78] sm:$0xff]
              %799 = vst [vmem:[%s767 + $0x78] sm:$0xff] %v798
              %v800 = vld [vmem:[%s766 + $0x80] sm:$0xff]
              %801 = vst [vmem:[%s767 + $0x80] sm:$0xff] %v800
              %v802 = vld [vmem:[%s766 + $0x88] sm:$0xff]
              %803 = vst [vmem:[%s767 + $0x88] sm:$0xff] %v802
              %v804 = vld [vmem:[%s766 + $0x90] sm:$0xff]
              %805 = vst [vmem:[%s767 + $0x90] sm:$0xff] %v804
              %v806 = vld [vmem:[%s766 + $0x98] sm:$0xff]
              %807 = vst [vmem:[%s767 + $0x98] sm:$0xff] %v806
              %v808 = vld [vmem:[%s766 + $0xa0] sm:$0xff]
              %809 = vst [vmem:[%s767 + $0xa0] sm:$0xff] %v808
              %v810 = vld [vmem:[%s766 + $0xa8] sm:$0xff]
              %811 = vst [vmem:[%s767 + $0xa8] sm:$0xff] %v810
              %v812 = vld [vmem:[%s766 + $0xb0] sm:$0xff]
              %813 = vst [vmem:[%s767 + $0xb0] sm:$0xff] %v812
              %v814 = vld [vmem:[%s766 + $0xb8] sm:$0xff]
              %815 = vst [vmem:[%s767 + $0xb8] sm:$0xff] %v814
              %v816 = vld [vmem:[%s766 + $0xc0] sm:$0xff]
              %817 = vst [vmem:[%s767 + $0xc0] sm:$0xff] %v816
              %v818 = vld [vmem:[%s766 + $0xc8] sm:$0xff]
              %819 = vst [vmem:[%s767 + $0xc8] sm:$0xff] %v818
              %v820 = vld [vmem:[%s766 + $0xd0] sm:$0xff]
              %821 = vst [vmem:[%s767 + $0xd0] sm:$0xff] %v820
              %v822 = vld [vmem:[%s766 + $0xd8] sm:$0xff]
              %823 = vst [vmem:[%s767 + $0xd8] sm:$0xff] %v822
              %v824 = vld [vmem:[%s766 + $0xe0] sm:$0xff]
              %825 = vst [vmem:[%s767 + $0xe0] sm:$0xff] %v824
              %v826 = vld [vmem:[%s766 + $0xe8] sm:$0xff]
              %827 = vst [vmem:[%s767 + $0xe8] sm:$0xff] %v826
              %v828 = vld [vmem:[%s766 + $0xf0] sm:$0xff]
              %829 = vst [vmem:[%s767 + $0xf0] sm:$0xff] %v828
              %v830 = vld [vmem:[%s766 + $0xf8] sm:$0xff]
              %831 = vst [vmem:[%s767 + $0xf8] sm:$0xff] %v830
              %v832 = vld [vmem:[%s766 + $0x100] sm:$0xff]
              %833 = vst [vmem:[%s767 + $0x100] sm:$0xff] %v832
              %v834 = vld [vmem:[%s766 + $0x108] sm:$0xff]
              %835 = vst [vmem:[%s767 + $0x108] sm:$0xff] %v834
              %v836 = vld [vmem:[%s766 + $0x110] sm:$0xff]
              %837 = vst [vmem:[%s767 + $0x110] sm:$0xff] %v836
              %v838 = vld [vmem:[%s766 + $0x118] sm:$0xff]
              %839 = vst [vmem:[%s767 + $0x118] sm:$0xff] %v838
              %v840 = vld [vmem:[%s766 + $0x120] sm:$0xff]
              %841 = vst [vmem:[%s767 + $0x120] sm:$0xff] %v840
              %v842 = vld [vmem:[%s766 + $0x128] sm:$0xff]
              %843 = vst [vmem:[%s767 + $0x128] sm:$0xff] %v842
            $region45: #{tpu_custom_call.1} parent=39 // loop_footer
              %s765 = sadd.s32 1, %s761
            $region46: #{tpu_custom_call.1} parent=39 // loop_footer_branch
              %760 = sbr.rel target = $region42
            $region47: #{tpu_custom_call.1} parent=39 // loop_exit
              _
          $region40: #{tpu_custom_call.1} parent=24 // pred_fallthru
            _
          // Predicated region
          $region48: #{tpu_custom_call.1} parent=24 // pred_check
            _
          $region49: #{tpu_custom_call.1} parent=24 // pred_check_branch
            %845 = sbr.rel target = $region51
          $region50: #{tpu_custom_call.1} parent=24 // pred_region
            _
          $region51: #{tpu_custom_call.1} parent=24 // pred_fallthru
            _
        $region25: #{tpu_custom_call.1} parent=20 // pred_fallthru
          _
        // Predicated region
        $region26: #{tpu_custom_call.1} parent=20 // pred_check
          _
        $region27: #{tpu_custom_call.1} parent=20 // pred_check_branch
          %672 = sbr.rel target = $region29
        $region28: #{tpu_custom_call.1} parent=20 // pred_region
          loop: start=0, step=1, limit=1
          $region30: #{tpu_custom_call.1} parent=28 // loop_pre_header
            _
          $region31: #{tpu_custom_call.1} parent=28 // loop_header
            %s675 = sphi 0, %s679
            %p676 = scmp.ge.s32.totalorder %s675, 1
            %s680 = sphi [#allocation2], [#allocation2]
            %s681 = sphi %s3, %s3
          $region32: #{tpu_custom_call.1} parent=28 // loop_header_branch
            %678 = sbr.rel (%p676) target = $region36
          $region33: #{tpu_custom_call.1} parent=28 // loop_body
            %v682 = vld [vmem:[%s680] sm:$0xff]
            %683 = vst [vmem:[%s681] sm:$0xff] %v682
            %v684 = vld [vmem:[%s680 + $0x8] sm:$0xff]
            %685 = vst [vmem:[%s681 + $0x8] sm:$0xff] %v684
            %v686 = vld [vmem:[%s680 + $0x10] sm:$0xff]
            %687 = vst [vmem:[%s681 + $0x10] sm:$0xff] %v686
            %v688 = vld [vmem:[%s680 + $0x18] sm:$0xff]
            %689 = vst [vmem:[%s681 + $0x18] sm:$0xff] %v688
            %v690 = vld [vmem:[%s680 + $0x20] sm:$0xff]
            %691 = vst [vmem:[%s681 + $0x20] sm:$0xff] %v690
            %v692 = vld [vmem:[%s680 + $0x28] sm:$0xff]
            %693 = vst [vmem:[%s681 + $0x28] sm:$0xff] %v692
            %v694 = vld [vmem:[%s680 + $0x30] sm:$0xff]
            %695 = vst [vmem:[%s681 + $0x30] sm:$0xff] %v694
            %v696 = vld [vmem:[%s680 + $0x38] sm:$0xff]
            %697 = vst [vmem:[%s681 + $0x38] sm:$0xff] %v696
            %v698 = vld [vmem:[%s680 + $0x40] sm:$0xff]
            %699 = vst [vmem:[%s681 + $0x40] sm:$0xff] %v698
            %v700 = vld [vmem:[%s680 + $0x48] sm:$0xff]
            %701 = vst [vmem:[%s681 + $0x48] sm:$0xff] %v700
            %v702 = vld [vmem:[%s680 + $0x50] sm:$0xff]
            %703 = vst [vmem:[%s681 + $0x50] sm:$0xff] %v702
            %v704 = vld [vmem:[%s680 + $0x58] sm:$0xff]
            %705 = vst [vmem:[%s681 + $0x58] sm:$0xff] %v704
            %v706 = vld [vmem:[%s680 + $0x60] sm:$0xff]
            %707 = vst [vmem:[%s681 + $0x60] sm:$0xff] %v706
            %v708 = vld [vmem:[%s680 + $0x68] sm:$0xff]
            %709 = vst [vmem:[%s681 + $0x68] sm:$0xff] %v708
            %v710 = vld [vmem:[%s680 + $0x70] sm:$0xff]
            %711 = vst [vmem:[%s681 + $0x70] sm:$0xff] %v710
            %v712 = vld [vmem:[%s680 + $0x78] sm:$0xff]
            %713 = vst [vmem:[%s681 + $0x78] sm:$0xff] %v712
            %v714 = vld [vmem:[%s680 + $0x80] sm:$0xff]
            %715 = vst [vmem:[%s681 + $0x80] sm:$0xff] %v714
            %v716 = vld [vmem:[%s680 + $0x88] sm:$0xff]
            %717 = vst [vmem:[%s681 + $0x88] sm:$0xff] %v716
            %v718 = vld [vmem:[%s680 + $0x90] sm:$0xff]
            %719 = vst [vmem:[%s681 + $0x90] sm:$0xff] %v718
            %v720 = vld [vmem:[%s680 + $0x98] sm:$0xff]
            %721 = vst [vmem:[%s681 + $0x98] sm:$0xff] %v720
            %v722 = vld [vmem:[%s680 + $0xa0] sm:$0xff]
            %723 = vst [vmem:[%s681 + $0xa0] sm:$0xff] %v722
            %v724 = vld [vmem:[%s680 + $0xa8] sm:$0xff]
            %725 = vst [vmem:[%s681 + $0xa8] sm:$0xff] %v724
            %v726 = vld [vmem:[%s680 + $0xb0] sm:$0xff]
            %727 = vst [vmem:[%s681 + $0xb0] sm:$0xff] %v726
            %v728 = vld [vmem:[%s680 + $0xb8] sm:$0xff]
            %729 = vst [vmem:[%s681 + $0xb8] sm:$0xff] %v728
            %v730 = vld [vmem:[%s680 + $0xc0] sm:$0xff]
            %731 = vst [vmem:[%s681 + $0xc0] sm:$0xff] %v730
            %v732 = vld [vmem:[%s680 + $0xc8] sm:$0xff]
            %733 = vst [vmem:[%s681 + $0xc8] sm:$0xff] %v732
            %v734 = vld [vmem:[%s680 + $0xd0] sm:$0xff]
            %735 = vst [vmem:[%s681 + $0xd0] sm:$0xff] %v734
            %v736 = vld [vmem:[%s680 + $0xd8] sm:$0xff]
            %737 = vst [vmem:[%s681 + $0xd8] sm:$0xff] %v736
            %v738 = vld [vmem:[%s680 + $0xe0] sm:$0xff]
            %739 = vst [vmem:[%s681 + $0xe0] sm:$0xff] %v738
            %v740 = vld [vmem:[%s680 + $0xe8] sm:$0xff]
            %741 = vst [vmem:[%s681 + $0xe8] sm:$0xff] %v740
            %v742 = vld [vmem:[%s680 + $0xf0] sm:$0xff]
            %743 = vst [vmem:[%s681 + $0xf0] sm:$0xff] %v742
            %v744 = vld [vmem:[%s680 + $0xf8] sm:$0xff]
            %745 = vst [vmem:[%s681 + $0xf8] sm:$0xff] %v744
            %v746 = vld [vmem:[%s680 + $0x100] sm:$0xff]
            %747 = vst [vmem:[%s681 + $0x100] sm:$0xff] %v746
            %v748 = vld [vmem:[%s680 + $0x108] sm:$0xff]
            %749 = vst [vmem:[%s681 + $0x108] sm:$0xff] %v748
            %v750 = vld [vmem:[%s680 + $0x110] sm:$0xff]
            %751 = vst [vmem:[%s681 + $0x110] sm:$0xff] %v750
            %v752 = vld [vmem:[%s680 + $0x118] sm:$0xff]
            %753 = vst [vmem:[%s681 + $0x118] sm:$0xff] %v752
            %v754 = vld [vmem:[%s680 + $0x120] sm:$0xff]
            %755 = vst [vmem:[%s681 + $0x120] sm:$0xff] %v754
            %v756 = vld [vmem:[%s680 + $0x128] sm:$0xff]
            %757 = vst [vmem:[%s681 + $0x128] sm:$0xff] %v756
          $region34: #{tpu_custom_call.1} parent=28 // loop_footer
            %s679 = sadd.s32 1, %s675
          $region35: #{tpu_custom_call.1} parent=28 // loop_footer_branch
            %674 = sbr.rel target = $region31
          $region36: #{tpu_custom_call.1} parent=28 // loop_exit
            _
        $region29: #{tpu_custom_call.1} parent=20 // pred_fallthru
          _
      $region21: #{tpu_custom_call.1} parent=16 // pred_fallthru
        _
      %846 = vnop
    $region17: #{tpu_custom_call.1} parent=1 // pred_fallthru
      _
    // Predicated region
    $region52: #{tpu_custom_call.1} parent=1 // pred_check
      _
    $region53: #{tpu_custom_call.1} parent=1 // pred_check_branch
      %848 = sbr.rel (0) target = $region55
    $region54: #{tpu_custom_call.1} parent=1 // pred_region
      _
    $region55: #{tpu_custom_call.1} parent=1 // pred_fallthru
      _

</llo_original>
